<compile_context>
chip_gen: v7x
topology: tpu7x:2x2x1
jax: 0.10.0
libtpu: 0.0.40
codegen_flags: <defaults>
</compile_context>

<pallas_src>
import functools

import jax
import jax.numpy as jnp
from jax.experimental import pallas as pl
from jax.experimental.pallas import tpu as pltpu


def _round_up(a, b):
    return ((a + b - 1) // b) * b


def _cdist_kernel(x_ref, ct_ref, csq_ref, o_ref, *, apply_sqrt):
    # x_ref:   (TM, F)      tile of samples
    # ct_ref:  (F, K_pad)   centroids, pre-transposed (constant across grid)
    # csq_ref: (1, K_pad)   precomputed ||c||^2 (constant across grid)
    # o_ref:   (TM, K_pad)  distances (lane-dense output tile)
    x = x_ref[...].astype(jnp.float32)

    # ||x - c||^2 = ||x||^2 + ||c||^2 - 2 x.c   (cross term on the MXU)
    x_sq = jnp.sum(x * x, axis=-1, keepdims=True)                    # (TM, 1)
    dots = jnp.dot(x, ct_ref[...].astype(jnp.float32),
                   preferred_element_type=jnp.float32)               # (TM, K_pad)

    d2 = jnp.maximum(x_sq + csq_ref[...] - 2.0 * dots, 0.0)
    if apply_sqrt:
        o_ref[...] = jnp.sqrt(d2).astype(o_ref.dtype)
    else:
        o_ref[...] = d2.astype(o_ref.dtype)


def cdist_pallas(x, centroids, *, tile_m=512, squared=False):
    """Euclidean cdist(x, centroids) via a Pallas TPU kernel.

    x:         (N, F) float32
    centroids: (K, F) float32
    returns:   (N, K) float32  (squared distances if squared=True)
    """
    N, F = x.shape
    K, F2 = centroids.shape
    assert F == F2, "feature dims must match"
    out_dtype = jnp.float32

    # Lane-dense output: pad cluster axis up to a multiple of 128.
    K_pad = max(_round_up(K, 128), 128)

    # Batch tile: multiple of 8 (sublane), no larger than the padded batch.
    tm = min(int(tile_m), _round_up(N, 8))
    tm = max(_round_up(tm, 8), 8)
    N_pad = _round_up(N, tm)
    grid = (N_pad // tm,)

    # Pad inputs (padded rows/columns are zeros; they are sliced away below,
    # and zero-padded features/centroid columns are harmless for the math).
    x_p = x if N_pad == N else jnp.pad(x, ((0, N_pad - N), (0, 0)))
    ct = jnp.transpose(centroids)                                   # (F, K)
    if K_pad != K:
        ct = jnp.pad(ct, ((0, 0), (0, K_pad - K)))
    c_sq = jnp.sum(centroids.astype(jnp.float32) ** 2, axis=-1)[None, :]
    if K_pad != K:
        c_sq = jnp.pad(c_sq, ((0, 0), (0, K_pad - K)))

    # VMEM budget: double-buffered x tile + centroids + c_sq + output tile.
    elt = 4
    vmem_needed = (2 * tm * F * elt
                   + 2 * F * K_pad * elt
                   + 2 * 1 * K_pad * elt
                   + 2 * tm * K_pad * elt)
    vmem_limit = int(min(max(2 * vmem_needed, 4 * 1024 * 1024), 64 * 1024 * 1024))

    kernel = functools.partial(_cdist_kernel, apply_sqrt=not squared)

    out = pl.pallas_call(
        kernel,
        out_shape=jax.ShapeDtypeStruct((N_pad, K_pad), out_dtype),
        grid_spec=pltpu.PrefetchScalarGridSpec(
            num_scalar_prefetch=0,
            grid=grid,
            in_specs=[
                # tile of samples: (tm, F), walks down the batch dim
                pl.BlockSpec((tm, F), lambda i: (i, 0)),
                # full pre-transposed centroid matrix, same block every step
                pl.BlockSpec((F, K_pad), lambda i: (0, 0)),
                # precomputed ||c||^2, same block every step
                pl.BlockSpec((1, K_pad), lambda i: (0, 0)),
            ],
            out_specs=pl.BlockSpec((tm, K_pad), lambda i: (i, 0)),
        ),
        compiler_params=pltpu.CompilerParams(
            dimension_semantics=("parallel",),
            vmem_limit_bytes=vmem_limit,
        ),
    )(x_p, ct, c_sq)

    return out[:N, :K]


class FullyConnectedClusteringUCI:
    """JAX/Pallas port of the PyTorch module's forward pass."""

    def __init__(self, num_features, num_clusters, key):
        # nn.init.normal_(weight, mean=0.0, std=1.0)
        self.centroids = jax.random.normal(
            key, (num_clusters, num_features), dtype=jnp.float32
        )

    def forward(self, x):
        return cdist_pallas(x, self.centroids)

    def get_pseudo_labels(self, x):
        # argmin is monotone in squared distance -> skip sqrt.
        d2 = cdist_pallas(x, self.centroids, squared=True)
        return jnp.argmin(d2, axis=1)


if __name__ == "__main__":
    # Small UCI-like shapes: batch=16 samples, 32 features, 8 clusters.
    num_features = 32
    num_clusters = 8
    batch = 16

    key = jax.random.PRNGKey(0)
    k_w, k_x = jax.random.split(key)

    model = FullyConnectedClusteringUCI(num_features, num_clusters, k_w)
    x = jax.random.normal(k_x, (batch, num_features), dtype=jnp.float32)

    out = model.forward(x)
    out = jax.block_until_ready(out)

    labels = jax.block_until_ready(model.get_pseudo_labels(x))

    # Reference check against plain-JAX cdist (torch.cdist p=2 semantics).
    diff = x[:, None, :] - model.centroids[None, :, :]
    ref = jnp.sqrt(jnp.maximum(jnp.sum(diff * diff, axis=-1), 0.0))
    ref_labels = jnp.argmin(ref, axis=1)

    assert out.shape == (batch, num_clusters)
    assert jnp.allclose(out, ref, atol=1e-4, rtol=1e-4)
    assert jnp.array_equal(labels, ref_labels)

    # Exercise the multi-tile / padded-batch path too (N not divisible by tile).
    k_x2 = jax.random.split(k_x)[0]
    x_big = jax.random.normal(k_x2, (77, num_features), dtype=jnp.float32)
    out_big = jax.block_until_ready(cdist_pallas(x_big, model.centroids, tile_m=32))
    diff_b = x_big[:, None, :] - model.centroids[None, :, :]
    ref_big = jnp.sqrt(jnp.maximum(jnp.sum(diff_b * diff_b, axis=-1), 0.0))
    assert out_big.shape == (77, num_clusters)
    assert jnp.allclose(out_big, ref_big, atol=1e-4, rtol=1e-4)

    print("KERNEL_OK")
</pallas_src>

<mosaic_0001>
module attributes {stable_mosaic.version = 11 : i64} {
  func.func @_cdist_kernel(%arg0: i32, %arg1: memref<16x32xf32, #tpu.memory_space<vmem>>, %arg2: memref<32x128xf32, #tpu.memory_space<vmem>>, %arg3: memref<1x128xf32, #tpu.memory_space<vmem>>, %arg4: memref<16x128xf32, #tpu.memory_space<vmem>>) attributes {dimension_semantics = [#tpu.dimension_semantics<parallel>], iteration_bounds = array<i64: 1>, scalar_prefetch = 0 : i64, scratch_operands = 0 : i64, tpu.core_type = #tpu.core_type<tc>, window_params = [{transform_indices = @transform_0, window_bounds = array<i64: 16, 32>}, {pipeline_mode = #tpu.pipeline_mode<synchronous>, transform_indices = @transform_1, window_bounds = array<i64: 32, 128>}, {pipeline_mode = #tpu.pipeline_mode<synchronous>, transform_indices = @transform_2, window_bounds = array<i64: 1, 128>}, {transform_indices = @transform_3, window_bounds = array<i64: 16, 128>}]} {
    %c0 = arith.constant 0 : index
    %c0_0 = arith.constant 0 : index
    %0 = vector.load %arg1[%c0, %c0_0] : memref<16x32xf32, #tpu.memory_space<vmem>>, vector<16x32xf32>
    %1 = arith.mulf %0, %0 : vector<16x32xf32>
    %cst = arith.constant dense<0.000000e+00> : vector<16xf32>
    %2 = vector.multi_reduction <add>, %1, %cst [1] : vector<16x32xf32> to vector<16xf32>
    %3 = vector.shape_cast %2 : vector<16xf32> to vector<16x1xf32>
    %c0_1 = arith.constant 0 : index
    %c0_2 = arith.constant 0 : index
    %4 = vector.load %arg2[%c0_1, %c0_2] : memref<32x128xf32, #tpu.memory_space<vmem>>, vector<32x128xf32>
    %cst_3 = arith.constant dense<0.000000e+00> : vector<16x128xf32>
    %5 = tpu.matmul %0, %4, %cst_3 {dimension_numbers = #tpu.dot_dimension_numbers<[1], [0], [0], [1], [0, 0, 1, 1], [], []>} : vector<16x32xf32>, vector<32x128xf32>, vector<16x128xf32> -> vector<16x128xf32>
    %c0_4 = arith.constant 0 : index
    %c0_5 = arith.constant 0 : index
    %6 = vector.load %arg3[%c0_4, %c0_5] : memref<1x128xf32, #tpu.memory_space<vmem>>, vector<1x128xf32>
    %7 = vector.broadcast %3 : vector<16x1xf32> to vector<16x128xf32>
    %8 = vector.broadcast %6 : vector<1x128xf32> to vector<16x128xf32>
    %9 = arith.addf %7, %8 : vector<16x128xf32>
    %cst_6 = arith.constant 2.000000e+00 : f32
    %10 = vector.broadcast %cst_6 : f32 to vector<16x128xf32>
    %11 = arith.mulf %10, %5 : vector<16x128xf32>
    %12 = arith.subf %9, %11 : vector<16x128xf32>
    %cst_7 = arith.constant 0.000000e+00 : f32
    %13 = vector.broadcast %cst_7 : f32 to vector<16x128xf32>
    %14 = arith.maximumf %12, %13 : vector<16x128xf32>
    %15 = math.sqrt %14 : vector<16x128xf32>
    %c0_8 = arith.constant 0 : index
    %c0_9 = arith.constant 0 : index
    %16 = vector.load %arg4[%c0_8, %c0_9] : memref<16x128xf32, #tpu.memory_space<vmem>>, vector<16x128xf32>
    tpu.vector_store %arg4[%c0_8, %c0_9], %15 {strides = array<i32>} : memref<16x128xf32, #tpu.memory_space<vmem>>, vector<16x128xf32>,
    return
  }
  func.func @transform_0(%arg0: i32) -> (i32, i32) {
    %c0_i32 = arith.constant 0 : i32
    %c0_i32_0 = arith.constant 0 : i32
    return %arg0, %c0_i32 : i32, i32
  }
  func.func @transform_1(%arg0: i32) -> (i32, i32) {
    %c0_i32 = arith.constant 0 : i32
    %c0_i32_0 = arith.constant 0 : i32
    %c0_i32_1 = arith.constant 0 : i32
    return %c0_i32, %c0_i32_0 : i32, i32
  }
  func.func @transform_2(%arg0: i32) -> (i32, i32) {
    %c0_i32 = arith.constant 0 : i32
    %c0_i32_0 = arith.constant 0 : i32
    %c0_i32_1 = arith.constant 0 : i32
    return %c0_i32, %c0_i32_0 : i32, i32
  }
  func.func @transform_3(%arg0: i32) -> (i32, i32) {
    %c0_i32 = arith.constant 0 : i32
    %c0_i32_0 = arith.constant 0 : i32
    return %arg0, %c0_i32 : i32, i32
  }
}

</mosaic_0001>

<llo_original>
// kernel: tpu_custom_call.1
$region0: #{tpu_custom_call.1}
  #allocation0 [shape = 'u32[]', space=smem, size = 0x4, offset = 0x4, fixed_abs, tag = 'smem constant byte address 0x4 - core index']
  #allocation1 [shape = 'u32[144,128]{1,0:T(1,128)}', space=vmem, size = 0x12000, scoped, tag = 'internal scratch']
  %s0 = inlined_call_operand.hbm [shape: f32[16,32], index: 0, kind: input, shape index: {}]
  %s1 = inlined_call_operand.hbm [shape: f32[32,128], index: 1, kind: input, shape index: {}]
  %s2 = inlined_call_operand.vmem [shape: f32[1,128], index: 2, kind: input, shape index: {}]
  %s3 = inlined_call_operand.hbm [shape: f32[16,128], index: 3, kind: output, shape index: {}]
  %s4 = sld [smem:[#allocation0]]
  $region30: #{tpu_custom_call.1} parent=0
    _
  %s6 = ssub.s32 1, %s4
  %s7 = scalar_select 0, %s6, %s4
  $region1: #{tpu_custom_call.1} parent=0
    #allocation2 [shape = 'u8[8192]{0}', space=vmem, size = 0x2000, scoped, tag = 'input window, operand 0, single buffered']
    #allocation3 [shape = 's32[1]{0}', space=sflag, size = 0x4, scoped, tag = 'scoped memory for tpu_custom_call.1']
    #allocation4 [shape = 's32[1]{0}', space=sflag, size = 0x4, scoped, tag = 'scoped memory for tpu_custom_call.1']
    #allocation5 [shape = 'u8[16384]{0}', space=vmem, size = 0x4000, scoped, tag = 'input window, operand 1, single buffered']
    #allocation6 [shape = 's32[1]{0}', space=sflag, size = 0x4, scoped, tag = 'scoped memory for tpu_custom_call.1']
    #allocation7 [shape = 'u8[8192]{0}', space=vmem, size = 0x2000, scoped, tag = 'output window, operand 0, single buffered']
    %8 = vsyncpa [#allocation3], 0
    %9 = vsyncpa [#allocation6], 0
    %10 = vsyncpa [#allocation4], 0
    // Predicated region
    $region2: #{tpu_custom_call.1} parent=1 // pred_check
      _
    $region3: #{tpu_custom_call.1} parent=1 // pred_check_branch
      %12 = sbr.rel (0) target = $region5
    $region4: #{tpu_custom_call.1} parent=1 // pred_region
      %s14 = ssub.s32 256, 256
      %15 = vsyncadd [#allocation3], %s14
      %s16 = sshll.u32 [#allocation2], 4
      %s17 = int_to_ptr.vmem [resolvable:$true] %s16
      %22 = dma.hbm_to_vmem [thread:$0]  %s0, 256, %s17, [#allocation3], 128, 128, 8
    $region5: #{tpu_custom_call.1} parent=1 // pred_fallthru
      _
    // Predicated region
    $region6: #{tpu_custom_call.1} parent=1 // pred_check
      _
    $region7: #{tpu_custom_call.1} parent=1 // pred_check_branch
      %24 = sbr.rel (0) target = $region9
    $region8: #{tpu_custom_call.1} parent=1 // pred_region
      %s26 = ssub.s32 512, 512
      %27 = vsyncadd [#allocation6], %s26
      %s28 = sshll.u32 [#allocation5], 4
      %s29 = int_to_ptr.vmem [resolvable:$true] %s28
      %34 = dma.hbm_to_vmem [thread:$0]  %s1, 512, %s29, [#allocation6], 128, 128, 8
    $region9: #{tpu_custom_call.1} parent=1 // pred_fallthru
      _
    // Predicated region
    $region10: #{tpu_custom_call.1} parent=1 // pred_check
      _
    $region11: #{tpu_custom_call.1} parent=1 // pred_check_branch
      %36 = sbr.rel (0) target = $region13
    $region12: #{tpu_custom_call.1} parent=1 // pred_region
      _
    $region13: #{tpu_custom_call.1} parent=1 // pred_fallthru
      _
    // Predicated region
    $region14: #{tpu_custom_call.1} parent=1 // pred_check
      _
    $region15: #{tpu_custom_call.1} parent=1 // pred_check_branch
      %38 = sbr.rel (0) target = $region17
    $region16: #{tpu_custom_call.1} parent=1 // pred_region
      %39 = dma.done [#allocation3], 256
    $region17: #{tpu_custom_call.1} parent=1 // pred_fallthru
      _
    // Predicated region
    $region18: #{tpu_custom_call.1} parent=1 // pred_check
      _
    $region19: #{tpu_custom_call.1} parent=1 // pred_check_branch
      %41 = sbr.rel (0) target = $region21
    $region20: #{tpu_custom_call.1} parent=1 // pred_region
      %42 = dma.done [#allocation6], 512
    $region21: #{tpu_custom_call.1} parent=1 // pred_fallthru
      _
    %v43 = vld [vmem:[#allocation2] sm:$0xff]
    %v44 = vld [vmem:[#allocation2 + $0x8] sm:$0xff]
    %v45 = vmul.f32 %v43, %v43
    %v46 = vmul.f32 %v44, %v44
    %vm47 = vcmask 261120
    %v48 = vsel %vm47, %v45, 0.0
    %49 = vadd.xlane.f32.xlu0 %v48
    %v50 = vpop.xlane.xlu0 %49
    %v51 = vsel %vm47, %v46, 0.0
    %52 = vadd.xlane.f32.xlu0 %v51
    %v53 = vpop.xlane.xlu0 %52
    %v54 = vld [vmem:[#allocation5] sm:$0xff]
    %v55 = vld [vmem:[#allocation5 + $0x8] sm:$0xff]
    %v56 = vld [vmem:[#allocation5 + $0x10] sm:$0xff]
    %v57 = vld [vmem:[#allocation5 + $0x18] sm:$0xff]
    %v59 = vsel %vm47, %v43, 0
    %v62 = vsel %vm47, %v44, 0
    %64 = vmatprep.subr.mxu0 0.0
    %65 = vmatpush1.msra.mxu0 %v54
    %66 = vmatprep.subr.mxu0 0.0
    %67 = vmatpush1.msra.mxu0 %v55
    %68 = vmatprep.subr.mxu0 0.0
    %69 = vmatpush1.msra.mxu0 %v56
    %70 = vmatprep.subr.mxu0 0.0
    %71 = vmatpush1.msra.mxu0 %v57
    %72 = vmatprep.subr.mxu0 0.0
    %73 = vmatpush1.msra.mxu0 0.0
    %74 = vmatprep.subr.mxu0 0.0
    %75 = vmatpush1.msra.mxu0 0.0
    %76 = vmatprep.subr.mxu0 0.0
    %77 = vmatpush1.msra.mxu0 0.0
    %78 = vmatprep.subr.mxu0 0.0
    %79 = vmatpush1.msra.mxu0 0.0
    %80 = vmatprep.subr.mxu0 0.0
    %81 = vmatpush1.msra.mxu0 0.0
    %82 = vmatprep.subr.mxu0 0.0
    %83 = vmatpush1.msra.mxu0 0.0
    %84 = vmatprep.subr.mxu0 0.0
    %85 = vmatpush1.msra.mxu0 0.0
    %86 = vmatprep.subr.mxu0 0.0
    %87 = vmatpush1.msra.mxu0 0.0
    %88 = vmatprep.subr.mxu0 0.0
    %89 = vmatpush1.msra.mxu0 0.0
    %90 = vmatprep.subr.mxu0 0.0
    %91 = vmatpush1.msra.mxu0 0.0
    %92 = vmatprep.subr.mxu0 0.0
    %93 = vmatpush1.msra.mxu0 0.0
    %94 = vmatprep.subr.mxu0 0.0
    %95 = vmatpush1.msra.mxu0 0.0
    %96 = vmatprep.subr.mxu0 0.0
    %97 = vmatpush1.msra.mxu0 0.0
    %98 = vmatprep.subr.mxu0 0.0
    %99 = vmatpush1.msra.mxu0 0.0
    %100 = vmatprep.subr.mxu0 0.0
    %101 = vmatpush1.msra.mxu0 0.0
    %102 = vmatprep.subr.mxu0 0.0
    %103 = vmatpush1.msra.mxu0 0.0
    %104 = vmatprep.subr.mxu0 0.0
    %105 = vmatpush1.msra.mxu0 0.0
    %106 = vmatprep.subr.mxu0 0.0
    %107 = vmatpush1.msra.mxu0 0.0
    %108 = vmatprep.subr.mxu0 0.0
    %109 = vmatpush1.msra.mxu0 0.0
    %110 = vmatprep.subr.mxu0 0.0
    %111 = vmatpush1.msra.mxu0 0.0
    %112 = vmatprep.subr.mxu0 0.0
    %113 = vmatpush1.msra.mxu0 0.0
    %114 = vmatprep.subr.mxu0 0.0
    %115 = vmatpush1.msra.mxu0 0.0
    %116 = vmatprep.subr.mxu0 0.0
    %117 = vmatpush1.msra.mxu0 0.0
    %118 = vmatprep.subr.mxu0 0.0
    %119 = vmatpush1.msra.mxu0 0.0
    %120 = vmatprep.subr.mxu0 0.0
    %121 = vmatpush1.msra.mxu0 0.0
    %122 = vmatprep.subr.mxu0 0.0
    %123 = vmatpush1.msra.mxu0 0.0
    %124 = vmatprep.subr.mxu0 0.0
    %125 = vmatpush1.msra.mxu0 0.0
    %126 = vmatprep.subr.mxu0 0.0
    %127 = vmatpush1.msra.mxu0 0.0
    %128 = vmatprep.mubr.f32.mxu0 0.0
    %129 = vmatmul.mubr.f32.gmra.mrb[0].mxu0 %v59
    %v130 = vpop.f32.mrb[0].mxu0
    %v131 = vadd.f32 0.0, %v130
    %v132 = vpop.f32.mrb[0].mxu0
    %133 = vmatprep.mubr.f32.mxu0 0.0
    %134 = vmatmul.mubr.f32.gmra.mrb[0].mxu0 %v62
    %v135 = vpop.f32.mrb[0].mxu0
    %v136 = vadd.f32 0.0, %v135
    %v137 = vpop.f32.mrb[0].mxu0
    %138 = vdwg.mxu0
    %v139 = vld [vmem:[%s2] sm:$0x1]
    %v141 = vlaneseq
    %v142 = vshrl.u32 %v141, 7
    %v143 = vsub.s32 0, %v142
    %v144 = vrot.slane %v139, %v143
    %v146 = vadd.f32 %v50, %v144
    %v147 = vadd.f32 %v53, %v144
    %v148 = vmul.f32 %v131, 2.0
    %v149 = vmul.f32 %v136, 2.0
    %v150 = vsub.f32 %v146, %v148
    %v151 = vsub.f32 %v147, %v149
    %v152 = vmax.f32 %v150, 0.0
    %v153 = vmax.f32 %v151, 0.0
    %v154 = vrsqrt.pop %v152
    %v155 = vmul.f32 %v152, %v154
    %vm156 = vcmp.eq.f32.partialorder %v152, inf
    %v157 = vsel %vm156, %v152, %v155
    %vm158 = vcmp.eq.f32.partialorder %v152, 0.0
    %v159 = vand.u32 %v152, 2147483648
    %v160 = vsel %vm158, %v159, %v157
    %v161 = vrsqrt.pop %v153
    %v162 = vmul.f32 %v153, %v161
    %vm163 = vcmp.eq.f32.partialorder %v153, inf
    %v164 = vsel %vm163, %v153, %v162
    %vm165 = vcmp.eq.f32.partialorder %v153, 0.0
    %v166 = vand.u32 %v153, 2147483648
    %v167 = vsel %vm165, %v166, %v164
    %168 = vst [vmem:[#allocation7] sm:$0xff] %v160
    %169 = vst [vmem:[#allocation7 + $0x8] sm:$0xff] %v167
    // Predicated region
    $region22: #{tpu_custom_call.1} parent=1 // pred_check
      _
    $region23: #{tpu_custom_call.1} parent=1 // pred_check_branch
      %171 = sbr.rel (0) target = $region25
    $region24: #{tpu_custom_call.1} parent=1 // pred_region
      %s173 = ssub.s32 256, 256
      %174 = vsyncadd [#allocation4], %s173
      %s175 = sshll.u32 [#allocation7], 4
      %s176 = int_to_ptr.vmem [resolvable:$true] %s175
      %181 = dma.vmem_to_hbm [thread:$0]  %s176, 256, %s3, [#allocation4], 128, 128, 8
    $region25: #{tpu_custom_call.1} parent=1 // pred_fallthru
      _
    // Predicated region
    $region26: #{tpu_custom_call.1} parent=1 // pred_check
      _
    $region27: #{tpu_custom_call.1} parent=1 // pred_check_branch
      %183 = sbr.rel (0) target = $region29
    $region28: #{tpu_custom_call.1} parent=1 // pred_region
      %184 = dma.done [#allocation4], 256
    $region29: #{tpu_custom_call.1} parent=1 // pred_fallthru
      _
    %185 = vsyncpa [#allocation3], 1
    %186 = vsyncpa [#allocation6], 1
    %187 = vsyncpa [#allocation4], 1

</llo_original>
